<compile_context>
chip_gen: v6e
topology: v6e:2x2x1
jax: 0.10.0
libtpu: 0.0.40
codegen_flags: <defaults>
</compile_context>

<pallas_src>
import functools

import jax
import jax.numpy as jnp
from jax.experimental import pallas as pl
from jax.experimental.pallas import tpu as pltpu

_LANE = 128


def _round_up(x, m):
    return (x + m - 1) // m * m


def _pick_cols(batch, num_classes, budget_bytes=8 << 20):
    """Batch-tile (lane) width from a conservative per-step VMEM budget."""
    c_pad = _round_up(max(num_classes, 1), 8)
    per_col = 8 * c_pad * 4          # ~8 live (C_pad, tb) f32 buffers per step
    cols = (budget_bytes // per_col) // _LANE * _LANE
    cols = max(_LANE, min(cols, 1 << 14))
    return batch if batch <= cols else cols


def elr_kernel(logits_ref,   # (C, tb) logits block, native dtype
               old_ref,      # (C, tb) gathered running-target rows
               labels_ref,   # (1, tb) int32 labels
               new_ref,      # (C, tb) updated running-target rows (out)
               loss_ref,     # (2, tb) per-example [ce; elr] (out, f32)
               *, beta):
    logits = logits_ref[...].astype(jnp.float32)            # (C, tb)
    tgt = old_ref[...].astype(jnp.float32)                  # (C, tb)
    labels = labels_ref[...]                                 # (1, tb) int32
    C, tb = logits.shape

    # Softmax over classes (sublane axis); reciprocal-multiply on the (1, tb)
    # denominators instead of a full (C, tb) divide.
    col_max = jnp.max(logits, axis=0, keepdims=True)         # (1, tb)
    shifted = logits - col_max
    exps = jnp.exp(shifted)
    denom = jnp.sum(exps, axis=0, keepdims=True)             # (1, tb)
    y_pred = exps * pl.reciprocal(denom, approx=False)
    y_pred = jnp.clip(y_pred, 0.0001, 1.0 - 0.0001)          # torch.clamp

    # Running-target update (detached branch in torch; forward value identical).
    norm = y_pred * pl.reciprocal(jnp.sum(y_pred, axis=0, keepdims=True),
                                  approx=False)
    new_tgt = beta * tgt + (1.0 - beta) * norm
    new_ref[...] = new_tgt.astype(new_ref.dtype)

    # Cross entropy, reusing shifted/denom (no log_softmax materialization):
    #   ce = log(sum exp(shifted)) - shifted[label]
    class_idx = jax.lax.broadcasted_iota(jnp.int32, (C, tb), 0)
    picked = jnp.sum(jnp.where(class_idx == labels, shifted, 0.0),
                     axis=0, keepdims=True)                  # (1, tb)
    ce_per = jnp.log(denom) - picked                         # (1, tb)

    # ELR regularizer: log(1 - <new_target_row, y_pred>)
    elr_per = jnp.log(1.0 - jnp.sum(new_tgt * y_pred, axis=0, keepdims=True))

    # Lane-dense per-example output: row 0 = CE, row 1 = ELR.
    row_sel = jax.lax.broadcasted_iota(jnp.int32, (2, tb), 0)
    loss_ref[...] = jnp.where(row_sel == 0, ce_per, elr_per).astype(jnp.float32)


def elr_forward(index, output, label, target, *, beta=0.3, args_lambda=1.0):
    """Returns (final_loss, updated_target).  Mirrors elr_loss.forward."""
    B, C = output.shape

    idx = index.astype(jnp.int32)
    # Fused XLA gather of the running-target rows (one op, no per-row DMAs).
    old_rows_t = jnp.take(target, idx, axis=0).T             # (C, B)
    logits_t = output.T                                       # (C, B), no dtype cast
    labels2d = label.astype(jnp.int32).reshape(1, B)

    tb = _pick_cols(B, C)
    grid = (pl.cdiv(B, tb),)

    kernel = functools.partial(elr_kernel, beta=float(beta))

    new_rows_t, losses = pl.pallas_call(
        kernel,
        grid_spec=pltpu.PrefetchScalarGridSpec(
            num_scalar_prefetch=0,
            grid=grid,
            in_specs=[
                pl.BlockSpec((C, tb), lambda i: (0, i)),      # logits (C, tb)
                pl.BlockSpec((C, tb), lambda i: (0, i)),      # old target rows
                pl.BlockSpec((1, tb), lambda i: (0, i)),      # labels
            ],
            out_specs=(
                pl.BlockSpec((C, tb), lambda i: (0, i)),      # new target rows
                pl.BlockSpec((2, tb), lambda i: (0, i)),      # per-example losses
            ),
        ),
        out_shape=(
            jax.ShapeDtypeStruct((C, B), target.dtype),
            jax.ShapeDtypeStruct((2, B), jnp.float32),
        ),
        compiler_params=pltpu.CompilerParams(
            dimension_semantics=("parallel",)),
    )(logits_t, old_rows_t, labels2d)

    # Fused XLA scatter of the updated rows back into the table.
    new_rows = new_rows_t.T.astype(target.dtype)              # (B, C)
    new_target = target.at[idx].set(new_rows)

    ce_loss = jnp.mean(losses[0])
    elr_reg = jnp.mean(losses[1])
    return ce_loss + args_lambda * elr_reg, new_target


def _reference(index, output, label, target, beta=0.3, args_lambda=1.0):
    """Pure-JAX reference mirroring the PyTorch forward."""
    y_pred = jax.nn.softmax(output, axis=1)
    y_pred = jnp.clip(y_pred, 0.0001, 1.0 - 0.0001)
    norm = y_pred / jnp.sum(y_pred, axis=1, keepdims=True)
    new_rows = beta * target[index] + (1.0 - beta) * norm
    new_target = target.at[index].set(new_rows)
    log_sm = jax.nn.log_softmax(output, axis=1)
    ce = -jnp.mean(jnp.take_along_axis(log_sm, label[:, None], axis=1))
    elr = jnp.mean(jnp.log(1.0 - jnp.sum(new_rows * y_pred, axis=1)))
    return ce + args_lambda * elr, new_target


if __name__ == "__main__":
    num_examp, num_classes, batch = 32, 10, 8

    key = jax.random.PRNGKey(0)
    k_out, k_lab, k_idx, k_tgt = jax.random.split(key, 4)

    output = jax.random.normal(k_out, (batch, num_classes), dtype=jnp.float32)
    label = jax.random.randint(k_lab, (batch,), 0, num_classes, dtype=jnp.int32)
    index = jax.random.permutation(k_idx, num_examp)[:batch]      # unique indices
    # Non-trivial module state so the beta * target[index] branch is exercised.
    target = jax.nn.softmax(
        jax.random.normal(k_tgt, (num_examp, num_classes), dtype=jnp.float32),
        axis=1)

    fwd = jax.jit(lambda i, o, l, t: elr_forward(i, o, l, t,
                                                 beta=0.3, args_lambda=1.0))
    loss, new_target = fwd(index, output, label, target)
    loss = jax.block_until_ready(loss)
    new_target = jax.block_until_ready(new_target)

    ref_loss, ref_target = _reference(index, output, label, target)
    assert jnp.allclose(loss, ref_loss, atol=1e-5, rtol=1e-5), (loss, ref_loss)
    assert jnp.allclose(new_target, ref_target, atol=1e-5, rtol=1e-5)

    print("KERNEL_OK")
</pallas_src>

<mosaic_0001>
module attributes {stable_mosaic.version = 11 : i64} {
  func.func @elr_kernel(%arg0: i32, %arg1: memref<10x8xf32, #tpu.memory_space<vmem>>, %arg2: memref<10x8xf32, #tpu.memory_space<vmem>>, %arg3: memref<1x8xi32, #tpu.memory_space<vmem>>, %arg4: memref<10x8xf32, #tpu.memory_space<vmem>>, %arg5: memref<2x8xf32, #tpu.memory_space<vmem>>) attributes {dimension_semantics = [#tpu.dimension_semantics<parallel>], iteration_bounds = array<i64: 1>, scalar_prefetch = 0 : i64, scratch_operands = 0 : i64, tpu.core_type = #tpu.core_type<tc>, window_params = [{transform_indices = @transform_0, window_bounds = array<i64: 10, 8>}, {transform_indices = @transform_1, window_bounds = array<i64: 10, 8>}, {transform_indices = @transform_2, window_bounds = array<i64: 1, 8>}, {transform_indices = @transform_3, window_bounds = array<i64: 10, 8>}, {transform_indices = @transform_4, window_bounds = array<i64: 2, 8>}]} {
    %c0 = arith.constant 0 : index
    %c0_0 = arith.constant 0 : index
    %0 = vector.load %arg1[%c0, %c0_0] : memref<10x8xf32, #tpu.memory_space<vmem>>, vector<10x8xf32>
    %c0_1 = arith.constant 0 : index
    %c0_2 = arith.constant 0 : index
    %1 = vector.load %arg2[%c0_1, %c0_2] : memref<10x8xf32, #tpu.memory_space<vmem>>, vector<10x8xf32>
    %c0_3 = arith.constant 0 : index
    %c0_4 = arith.constant 0 : index
    %2 = vector.load %arg3[%c0_3, %c0_4] : memref<1x8xi32, #tpu.memory_space<vmem>>, vector<1x8xi32>
    %cst = arith.constant dense<0xFF800000> : vector<8xf32>
    %3 = vector.multi_reduction <maximumf>, %0, %cst [0] : vector<10x8xf32> to vector<8xf32>
    %4 = vector.shape_cast %3 : vector<8xf32> to vector<1x8xf32>
    %5 = vector.broadcast %4 : vector<1x8xf32> to vector<10x8xf32>
    %6 = arith.subf %0, %5 : vector<10x8xf32>
    %7 = math.exp %6 : vector<10x8xf32>
    %cst_5 = arith.constant dense<0.000000e+00> : vector<8xf32>
    %8 = vector.multi_reduction <add>, %7, %cst_5 [0] : vector<10x8xf32> to vector<8xf32>
    %9 = vector.shape_cast %8 : vector<8xf32> to vector<1x8xf32>
    %10 = tpu.reciprocal %9 : vector<1x8xf32> -> vector<1x8xf32>
    %11 = vector.broadcast %10 : vector<1x8xf32> to vector<10x8xf32>
    %12 = arith.mulf %7, %11 : vector<10x8xf32>
    %cst_6 = arith.constant 9.99999974E-5 : f32
    %cst_7 = arith.constant 0.999899983 : f32
    %13 = vector.broadcast %cst_6 : f32 to vector<10x8xf32>
    %14 = arith.maximumf %13, %12 : vector<10x8xf32>
    %15 = vector.broadcast %cst_7 : f32 to vector<10x8xf32>
    %16 = arith.minimumf %15, %14 : vector<10x8xf32>
    %cst_8 = arith.constant dense<0.000000e+00> : vector<8xf32>
    %17 = vector.multi_reduction <add>, %16, %cst_8 [0] : vector<10x8xf32> to vector<8xf32>
    %18 = vector.shape_cast %17 : vector<8xf32> to vector<1x8xf32>
    %19 = tpu.reciprocal %18 : vector<1x8xf32> -> vector<1x8xf32>
    %20 = vector.broadcast %19 : vector<1x8xf32> to vector<10x8xf32>
    %21 = arith.mulf %16, %20 : vector<10x8xf32>
    %cst_9 = arith.constant 3.000000e-01 : f32
    %22 = vector.broadcast %cst_9 : f32 to vector<10x8xf32>
    %23 = arith.mulf %22, %1 : vector<10x8xf32>
    %cst_10 = arith.constant 0.699999988 : f32
    %24 = vector.broadcast %cst_10 : f32 to vector<10x8xf32>
    %25 = arith.mulf %24, %21 : vector<10x8xf32>
    %26 = arith.addf %23, %25 : vector<10x8xf32>
    %c0_11 = arith.constant 0 : index
    %c0_12 = arith.constant 0 : index
    %27 = vector.load %arg4[%c0_11, %c0_12] : memref<10x8xf32, #tpu.memory_space<vmem>>, vector<10x8xf32>
    tpu.vector_store %arg4[%c0_11, %c0_12], %26 {strides = array<i32>} : memref<10x8xf32, #tpu.memory_space<vmem>>, vector<10x8xf32>,
    %28 = tpu.iota {dimensions = array<i32: 0>} : vector<10x8xi32>
    %29 = vector.broadcast %2 : vector<1x8xi32> to vector<10x8xi32>
    %30 = arith.cmpi eq, %28, %29 : vector<10x8xi32>
    %cst_13 = arith.constant 0.000000e+00 : f32
    %31 = vector.broadcast %cst_13 : f32 to vector<10x8xf32>
    %32 = arith.select %30, %6, %31 : vector<10x8xi1>, vector<10x8xf32>
    %cst_14 = arith.constant dense<0.000000e+00> : vector<8xf32>
    %33 = vector.multi_reduction <add>, %32, %cst_14 [0] : vector<10x8xf32> to vector<8xf32>
    %34 = vector.shape_cast %33 : vector<8xf32> to vector<1x8xf32>
    %35 = math.log %9 : vector<1x8xf32>
    %36 = arith.subf %35, %34 : vector<1x8xf32>
    %37 = arith.mulf %26, %16 : vector<10x8xf32>
    %cst_15 = arith.constant dense<0.000000e+00> : vector<8xf32>
    %38 = vector.multi_reduction <add>, %37, %cst_15 [0] : vector<10x8xf32> to vector<8xf32>
    %39 = vector.shape_cast %38 : vector<8xf32> to vector<1x8xf32>
    %cst_16 = arith.constant 1.000000e+00 : f32
    %40 = vector.broadcast %cst_16 : f32 to vector<1x8xf32>
    %41 = arith.subf %40, %39 : vector<1x8xf32>
    %42 = math.log %41 : vector<1x8xf32>
    %43 = tpu.iota {dimensions = array<i32: 0>} : vector<2x8xi32>
    %c0_i32 = arith.constant 0 : i32
    %44 = vector.broadcast %c0_i32 : i32 to vector<2x8xi32>
    %45 = arith.cmpi eq, %43, %44 : vector<2x8xi32>
    %46 = vector.shape_cast %36 : vector<1x8xf32> to vector<1x8xf32>
    %47 = vector.broadcast %46 : vector<1x8xf32> to vector<2x8xf32>
    %48 = vector.shape_cast %42 : vector<1x8xf32> to vector<1x8xf32>
    %49 = vector.broadcast %48 : vector<1x8xf32> to vector<2x8xf32>
    %50 = arith.select %45, %47, %49 : vector<2x8xi1>, vector<2x8xf32>
    %c0_17 = arith.constant 0 : index
    %c0_18 = arith.constant 0 : index
    %51 = vector.load %arg5[%c0_17, %c0_18] : memref<2x8xf32, #tpu.memory_space<vmem>>, vector<2x8xf32>
    tpu.vector_store %arg5[%c0_17, %c0_18], %50 {strides = array<i32>} : memref<2x8xf32, #tpu.memory_space<vmem>>, vector<2x8xf32>,
    return
  }
  func.func @transform_0(%arg0: i32) -> (i32, i32) {
    %c0_i32 = arith.constant 0 : i32
    %c0_i32_0 = arith.constant 0 : i32
    return %c0_i32, %arg0 : i32, i32
  }
  func.func @transform_1(%arg0: i32) -> (i32, i32) {
    %c0_i32 = arith.constant 0 : i32
    %c0_i32_0 = arith.constant 0 : i32
    return %c0_i32, %arg0 : i32, i32
  }
  func.func @transform_2(%arg0: i32) -> (i32, i32) {
    %c0_i32 = arith.constant 0 : i32
    %c0_i32_0 = arith.constant 0 : i32
    return %c0_i32, %arg0 : i32, i32
  }
  func.func @transform_3(%arg0: i32) -> (i32, i32) {
    %c0_i32 = arith.constant 0 : i32
    %c0_i32_0 = arith.constant 0 : i32
    return %c0_i32, %arg0 : i32, i32
  }
  func.func @transform_4(%arg0: i32) -> (i32, i32) {
    %c0_i32 = arith.constant 0 : i32
    %c0_i32_0 = arith.constant 0 : i32
    return %c0_i32, %arg0 : i32, i32
  }
}

</mosaic_0001>

<llo_original>
// kernel: _lambda_.1
$region0: #{_lambda_.1}
  #allocation0 [shape = 'u32[]', space=smem, size = 0x4, offset = 0x4, fixed_abs, tag = 'smem constant byte address 0x4 - core index']
  #allocation1 [shape = 'u32[144,128]{1,0:T(1,128)}', space=vmem, size = 0x12000, scoped, tag = 'internal scratch']
  %s0 = inlined_call_operand.vmem [shape: f32[10,8], index: 0, kind: input, shape index: {}]
  %s1 = inlined_call_operand.vmem [shape: f32[10,8], index: 1, kind: input, shape index: {}]
  %s2 = inlined_call_operand.vmem [shape: s32[1,8], index: 2, kind: input, shape index: {}]
  %s3 = inlined_call_operand.vmem [shape: f32[10,8], index: 3, kind: output, shape index: {0}]
  %s4 = inlined_call_operand.vmem [shape: f32[2,8], index: 4, kind: output, shape index: {1}]
  %5 = xla_tuple %s3, %s4
  %s6 = sld [smem:[#allocation0]]
  $region30: #{_lambda_.1} parent=0
    _
  %s8 = ssub.s32 1, %s6
  %s9 = scalar_select 0, %s8, %s6
  // Predicated region
  $region2: #{_lambda_.1} parent=0 // pred_check
    _
  $region3: #{_lambda_.1} parent=0 // pred_check_branch
    %11 = sbr.rel (0) target = $region5
  $region4: #{_lambda_.1} parent=0 // pred_region
    _
  $region5: #{_lambda_.1} parent=0 // pred_fallthru
    _
  // Predicated region
  $region6: #{_lambda_.1} parent=0 // pred_check
    _
  $region7: #{_lambda_.1} parent=0 // pred_check_branch
    %13 = sbr.rel (0) target = $region9
  $region8: #{_lambda_.1} parent=0 // pred_region
    _
  $region9: #{_lambda_.1} parent=0 // pred_fallthru
    _
  // Predicated region
  $region10: #{_lambda_.1} parent=0 // pred_check
    _
  $region11: #{_lambda_.1} parent=0 // pred_check_branch
    %15 = sbr.rel (0) target = $region13
  $region12: #{_lambda_.1} parent=0 // pred_region
    _
  $region13: #{_lambda_.1} parent=0 // pred_fallthru
    _
  %v16 = vld [vmem:[%s0] sm:$0xff]
  %v17 = vld [vmem:[%s0 + $0x8] sm:$0x3]
  %v18 = vld [vmem:[%s1] sm:$0xff]
  %v19 = vld [vmem:[%s1 + $0x8] sm:$0x3]
  %v20 = vld [vmem:[%s2] sm:$0x1]
  %vm21 = vcmask 64512
  %v22 = vsel %vm21, %v16, -inf
  %vm23 = vcmask 58368
  %v24 = vsel %vm23, %v17, -inf
  %v25 = vmax.f32 %v22, %v24
  %v26 = vrot.slane %v25, 4
  %v27 = vmax.f32 %v25, %v26
  %v28 = vrot.slane %v27, 2
  %v29 = vmax.f32 %v27, %v28
  %v30 = vrot.slane %v29, 1
  %v31 = vmax.f32 %v29, %v30
  %v32 = vsub.f32 %v16, %v31
  %v33 = vsub.f32 %v17, %v31
  %v34 = vmul.f32 %v32, 1.442695
  %v35 = vpow.pop %v34
  %v36 = vmul.f32 %v33, 1.442695
  %v37 = vpow.pop %v36
  %v38 = vsel %vm21, %v35, 0.0
  %v39 = vsel %vm23, %v37, 0.0
  %v40 = vadd.f32 %v38, %v39
  %v41 = vrot.slane %v40, 4
  %v42 = vadd.f32 %v40, %v41
  %v43 = vrot.slane %v42, 2
  %v44 = vadd.f32 %v42, %v43
  %v45 = vrot.slane %v44, 1
  %v46 = vadd.f32 %v44, %v45
  %v47 = vrcp.pop %v46
  %v48 = vmul.f32 %v35, %v47
  %v49 = vmul.f32 %v37, %v47
  %v50 = vmax.f32 %v48, 0.0001
  %v51 = vmax.f32 %v49, 0.0001
  %v52 = vmin.f32 %v50, 0.9999
  %v53 = vmin.f32 %v51, 0.9999
  %v54 = vsel %vm21, %v52, 0.0
  %v55 = vsel %vm23, %v53, 0.0
  %v56 = vadd.f32 %v54, %v55
  %v57 = vrot.slane %v56, 4
  %v58 = vadd.f32 %v56, %v57
  %v59 = vrot.slane %v58, 2
  %v60 = vadd.f32 %v58, %v59
  %v61 = vrot.slane %v60, 1
  %v62 = vadd.f32 %v60, %v61
  %v63 = vrcp.pop %v62
  %v64 = vmul.f32 %v52, %v63
  %v65 = vmul.f32 %v53, %v63
  %v66 = vmul.f32 %v18, 0.3
  %v67 = vmul.f32 %v19, 0.3
  %v68 = vmul.f32 %v64, 0.7
  %v69 = vmul.f32 %v65, 0.7
  %v70 = vadd.f32 %v66, %v68
  %v71 = vadd.f32 %v67, %v69
  %72 = vst.msk [vmem:[%s3] sm:$0xff] %vm21, %v70
  %73 = vst.msk [vmem:[%s3 + $0x8] sm:$0x3] %vm23, %v71
  %v74 = vlaneseq
  %v75 = vshrl.u32 %v74, 7
  %v76 = vadd.s32 %v75, 8
  %v77 = vlaneseq
  %v78 = vshrl.u32 %v77, 7
  %v79 = vsub.s32 0, %v78
  %v80 = vrot.slane %v20, %v79
  %vm81 = vcmp.eq.s32.totalorder %v75, %v80
  %vm82 = vcmp.eq.s32.totalorder %v76, %v80
  %v83 = vsel %vm81, %v32, 0.0
  %v84 = vsel %vm82, %v33, 0.0
  %v85 = vsel %vm21, %v83, 0.0
  %v86 = vsel %vm23, %v84, 0.0
  %v87 = vadd.f32 %v85, %v86
  %v88 = vrot.slane %v87, 4
  %v89 = vadd.f32 %v87, %v88
  %v90 = vrot.slane %v89, 2
  %v91 = vadd.f32 %v89, %v90
  %v92 = vrot.slane %v91, 1
  %v93 = vadd.f32 %v91, %v92
  %v94 = vlog2.pop %v46
  %v95 = vmul.f32 %v94, 0.6931472
  %v96 = vsub.f32 %v95, %v93
  %v97 = vmul.f32 %v70, %v52
  %v98 = vmul.f32 %v71, %v53
  %v99 = vsel %vm21, %v97, 0.0
  %v100 = vsel %vm23, %v98, 0.0
  %v101 = vadd.f32 %v99, %v100
  %v102 = vrot.slane %v101, 4
  %v103 = vadd.f32 %v101, %v102
  %v104 = vrot.slane %v103, 2
  %v105 = vadd.f32 %v103, %v104
  %v106 = vrot.slane %v105, 1
  %v107 = vadd.f32 %v105, %v106
  %v108 = vsub.f32 1.0, %v107
  %v109 = vlog2.pop %v108
  %v110 = vmul.f32 %v109, 0.6931472
  %vm111 = vcmp.eq.s32.totalorder %v75, 0
  %v112 = vsel %vm111, %v96, %v110
  %113 = vst.msk [vmem:[%s4] sm:$0x3] %vm23, %v112
  // Predicated region
  $region14: #{_lambda_.1} parent=0 // pred_check
    _
  $region15: #{_lambda_.1} parent=0 // pred_check_branch
    %115 = sbr.rel (0) target = $region17
  $region16: #{_lambda_.1} parent=0 // pred_region
    _
  $region17: #{_lambda_.1} parent=0 // pred_fallthru
    _
  // Predicated region
  $region18: #{_lambda_.1} parent=0 // pred_check
    _
  $region19: #{_lambda_.1} parent=0 // pred_check_branch
    %117 = sbr.rel (0) target = $region21
  $region20: #{_lambda_.1} parent=0 // pred_region
    _
  $region21: #{_lambda_.1} parent=0 // pred_fallthru
    _
  // Predicated region
  $region22: #{_lambda_.1} parent=0 // pred_check
    _
  $region23: #{_lambda_.1} parent=0 // pred_check_branch
    %119 = sbr.rel (0) target = $region25
  $region24: #{_lambda_.1} parent=0 // pred_region
    _
  $region25: #{_lambda_.1} parent=0 // pred_fallthru
    _
  // Predicated region
  $region26: #{_lambda_.1} parent=0 // pred_check
    _
  $region27: #{_lambda_.1} parent=0 // pred_check_branch
    %121 = sbr.rel (0) target = $region29
  $region28: #{_lambda_.1} parent=0 // pred_region
    _
  $region29: #{_lambda_.1} parent=0 // pred_fallthru
    _

</llo_original>
